<compile_context>
chip_gen: v6e
topology: v6e:2x2x1
jax: 0.10.0
libtpu: 0.0.40
codegen_flags: <defaults>
</compile_context>

<pallas_src>
import functools

import jax
import jax.numpy as jnp
from jax import lax
from jax.experimental import pallas as pl
from jax.experimental.pallas import tpu as pltpu


_LANE = 128
# Per-input-block byte budget: safe on v7x (64 MiB physical / 32 MiB scoped
# default) with double-buffered in+out, and big enough that DMAs are long and
# the ~0.35us per-grid-step overhead is fully amortized on v5e/v6e too.
_IN_BLOCK_BUDGET_BYTES = 4 * 1024 * 1024


def _round_up(a, b):
    return (a + b - 1) // b * b


@functools.partial(jax.jit, static_argnums=(1, 2))
def maxpool2d_pallas(x_nchw, kernel_size, stride):
    """Max pooling over NCHW input: window=kernel_size, stride=stride, VALID padding."""
    N, C, H, W = x_nchw.shape
    f, s = int(kernel_size), int(stride)
    H_out = (H - f) // s + 1
    W_out = (W - f) // s + 1
    NC = N * C
    L = NC * H_out * W_out                      # fused flat-NCHW output length
    dtype = x_nchw.dtype
    itemsize = jnp.dtype(dtype).itemsize

    # ---- wrapper relayout: window-major, lane-fused -------------------------
    # Build xw[k, l] = x[n, c, ho*s + di, wo*s + dj] with k = di*f + dj and
    # l = ((n*C + c)*H_out + ho)*W_out + wo.  The kernel only has to take an
    # elementwise max over the tiny leading k axis (fully lane-dense), and the
    # result is already in flat NCHW order, so no output transpose is needed.
    if s == f:
        # Non-overlapping windows: pure relayout of the (VALID-cropped) input,
        # a single XLA transpose-copy (replaces v2's two full transposes).
        xc = x_nchw[:, :, :H_out * f, :W_out * f]
        xw = xc.reshape(NC, H_out, f, W_out, f)
        xw = jnp.transpose(xw, (2, 4, 0, 1, 3)).reshape(f * f, L)
    else:
        # Overlapping / skipping windows: stack the f*f strided window slices
        # in the wrapper.  VMEM stays O(block) on every generation (the v2
        # fallback kept the whole H*W*NC block resident — fatal on v7x).
        # TODO(synk): an in-kernel overlapping row-slab pipeline (pl.Element
        # row offsets or a manual double-buffered DMA) would avoid the
        # ~(f/s)^2 HBM expansion this incurs when windows overlap.
        slices = []
        for di in range(f):
            for dj in range(f):
                sl = x_nchw[:, :,
                            di:di + (H_out - 1) * s + 1:s,
                            dj:dj + (W_out - 1) * s + 1:s]
                slices.append(sl.reshape(1, L))
        xw = jnp.concatenate(slices, axis=0)

    # ---- block sizing --------------------------------------------------------
    M = _round_up(L, _LANE) // _LANE            # number of 128-lane rows
    bytes_per_row = f * f * _LANE * itemsize    # input bytes per lane-row
    rows_cap = max(8, (_IN_BLOCK_BUDGET_BYTES // bytes_per_row) // 8 * 8)
    if M <= 8:
        # Fits in a single (<=8, 128) tile: cannot be split lane/sublane-
        # densely across v7x's two TensorCores; one grid step is optimal.
        TM = M
    else:
        # At least two grid steps (both v7x TensorCores busy), capped by the
        # VMEM byte budget, multiple of 8 for dense sublane tiling.
        half = _round_up((M + 1) // 2, 8)
        TM = max(8, min(rows_cap, half))

    # Pad the fused axis so TM divides it exactly: no partial blocks, and the
    # pad can only produce padded output rows (sliced off below), so it can
    # never leak into a valid max.
    Mp = _round_up(M, TM)
    Lpad = Mp * _LANE
    if Lpad != L:
        xw = jnp.pad(xw, ((0, 0), (0, Lpad - L)))
    xw = xw.reshape(f * f, Mp, _LANE)
    grid_m = Mp // TM

    in_block_bytes = f * f * TM * _LANE * itemsize
    out_block_bytes = TM * _LANE * itemsize
    # Double-buffered input + output, 2x margin; explicit so the scoped VMEM
    # default (16 MiB on v5e) never gates the block size.
    vmem_limit = 4 * (in_block_bytes + out_block_bytes)
    vmem_limit = int(min(max(vmem_limit, 16 * 1024 * 1024), 32 * 1024 * 1024))

    # ---- kernel --------------------------------------------------------------
    def kernel(x_ref, o_ref):
        # x_ref: (f*f, TM, 128)   o_ref: (TM, 128)
        # Tiny static unroll over the window offsets; every load/max/store is a
        # dense (TM, 128) tile op.  Max in native dtype (exact), accumulator
        # seeded from the first window element.
        acc = x_ref[0]
        for k in range(1, f * f):
            acc = jnp.maximum(acc, x_ref[k])
        o_ref[...] = acc

    out_flat = pl.pallas_call(
        kernel,
        out_shape=jax.ShapeDtypeStruct((Mp, _LANE), dtype),
        grid=(grid_m,),
        in_specs=[pl.BlockSpec((f * f, TM, _LANE), lambda m: (0, m, 0))],
        out_specs=pl.BlockSpec((TM, _LANE), lambda m: (m, 0)),
        compiler_params=pltpu.CompilerParams(
            dimension_semantics=("parallel",),
            vmem_limit_bytes=vmem_limit,
        ),
    )(xw)

    # Cheap epilogue on the f*f-times-smaller output: drop the lane padding and
    # view as NCHW (reshape/slice only — no transpose).
    return out_flat.reshape(Lpad)[:L].reshape(N, C, H_out, W_out)


class MaxPooling:
    """JAX/Pallas port of models/modules_asic.py::MaxPooling (forward only)."""

    def __init__(self, kernel_size, stride):
        self.kernel_size = kernel_size
        self.stride = stride
        self.name = "MaxPool2d"
        self.type = "pool"

    def __call__(self, x):
        self.input = x
        self.out = maxpool2d_pallas(x, self.kernel_size, self.stride)
        self.N, self.C, self.H, self.W = self.out.shape
        return self.out

    # TODO(synk): feed_backward / maxpoolBackward (gradient routing to argmax
    # positions) is a separate backward op in the original module and is not
    # part of this forward-pass port.


if __name__ == "__main__":
    def ref_pool(x, f, s):
        return lax.reduce_window(
            x, jnp.array(-jnp.inf, dtype=x.dtype), lax.max,
            window_dimensions=(1, 1, f, f),
            window_strides=(1, 1, s, s),
            padding="VALID",
        )

    key = jax.random.PRNGKey(0)

    # 1) Module's typical shape: 2x2 window, stride 2 (single small block).
    x = jax.random.normal(key, (2, 4, 16, 16), dtype=jnp.float32)
    pool = MaxPooling(kernel_size=2, stride=2)
    out = jax.block_until_ready(pool(x))
    assert out.shape == (2, 4, 8, 8), out.shape
    assert out.dtype == x.dtype
    assert bool(jnp.array_equal(out, ref_pool(x, 2, 2))), "mismatch (2x2/s2)"

    # 2) Multi-grid-step path (>= 2 blocks, both TCs on v7x).
    x2 = jax.random.normal(jax.random.PRNGKey(1), (2, 4, 64, 32), dtype=jnp.float32)
    out2 = jax.block_until_ready(MaxPooling(2, 2)(x2))
    assert bool(jnp.array_equal(out2, ref_pool(x2, 2, 2))), "mismatch (tiled)"

    # 3) Overlapping windows (stride != kernel_size).
    x3 = jax.random.normal(jax.random.PRNGKey(2), (2, 4, 16, 16), dtype=jnp.float32)
    out3 = jax.block_until_ready(MaxPooling(3, 2)(x3))
    assert bool(jnp.array_equal(out3, ref_pool(x3, 3, 2))), "mismatch (3x3/s2)"

    # 4) Odd spatial dims: VALID crop + lane-padding path.
    x4 = jax.random.normal(jax.random.PRNGKey(3), (2, 4, 17, 19), dtype=jnp.float32)
    out4 = jax.block_until_ready(MaxPooling(2, 2)(x4))
    assert bool(jnp.array_equal(out4, ref_pool(x4, 2, 2))), "mismatch (17x19)"

    # 5) Awkward row count: M not a multiple of TM -> row padding path.
    x5 = jax.random.normal(jax.random.PRNGKey(4), (2, 4, 40, 40), dtype=jnp.float32)
    out5 = jax.block_until_ready(MaxPooling(2, 2)(x5))
    assert bool(jnp.array_equal(out5, ref_pool(x5, 2, 2))), "mismatch (40x40)"

    # 6) bf16 stays native end to end (max is exact in any dtype).
    x6 = jax.random.normal(jax.random.PRNGKey(5), (2, 4, 32, 32)).astype(jnp.bfloat16)
    out6 = jax.block_until_ready(MaxPooling(2, 2)(x6))
    assert out6.dtype == jnp.bfloat16
    assert bool(jnp.array_equal(out6, ref_pool(x6, 2, 2))), "mismatch (bf16)"

    print("KERNEL_OK")
</pallas_src>

<mosaic_0001>
module attributes {stable_mosaic.version = 11 : i64} {
  func.func @kernel(%arg0: i32, %arg1: memref<4x4x128xf32, #tpu.memory_space<vmem>>, %arg2: memref<4x128xf32, #tpu.memory_space<vmem>>) attributes {dimension_semantics = [#tpu.dimension_semantics<parallel>], iteration_bounds = array<i64: 1>, scalar_prefetch = 0 : i64, scratch_operands = 0 : i64, tpu.core_type = #tpu.core_type<tc>, window_params = [{transform_indices = @transform_0, window_bounds = array<i64: 4, 4, 128>}, {transform_indices = @transform_1, window_bounds = array<i64: 4, 128>}]} {
    %c0 = arith.constant 0 : index
    %c0_0 = arith.constant 0 : index
    %c0_1 = arith.constant 0 : index
    %0 = vector.load %arg1[%c0, %c0_0, %c0_1] : memref<4x4x128xf32, #tpu.memory_space<vmem>>, vector<1x4x128xf32>
    %1 = vector.shape_cast %0 : vector<1x4x128xf32> to vector<4x128xf32>
    %c1 = arith.constant 1 : index
    %c0_2 = arith.constant 0 : index
    %c0_3 = arith.constant 0 : index
    %2 = vector.load %arg1[%c1, %c0_2, %c0_3] : memref<4x4x128xf32, #tpu.memory_space<vmem>>, vector<1x4x128xf32>
    %3 = vector.shape_cast %2 : vector<1x4x128xf32> to vector<4x128xf32>
    %4 = arith.maximumf %1, %3 : vector<4x128xf32>
    %c2 = arith.constant 2 : index
    %c0_4 = arith.constant 0 : index
    %c0_5 = arith.constant 0 : index
    %5 = vector.load %arg1[%c2, %c0_4, %c0_5] : memref<4x4x128xf32, #tpu.memory_space<vmem>>, vector<1x4x128xf32>
    %6 = vector.shape_cast %5 : vector<1x4x128xf32> to vector<4x128xf32>
    %7 = arith.maximumf %4, %6 : vector<4x128xf32>
    %c3 = arith.constant 3 : index
    %c0_6 = arith.constant 0 : index
    %c0_7 = arith.constant 0 : index
    %8 = vector.load %arg1[%c3, %c0_6, %c0_7] : memref<4x4x128xf32, #tpu.memory_space<vmem>>, vector<1x4x128xf32>
    %9 = vector.shape_cast %8 : vector<1x4x128xf32> to vector<4x128xf32>
    %10 = arith.maximumf %7, %9 : vector<4x128xf32>
    %c0_8 = arith.constant 0 : index
    %c0_9 = arith.constant 0 : index
    %11 = vector.load %arg2[%c0_8, %c0_9] : memref<4x128xf32, #tpu.memory_space<vmem>>, vector<4x128xf32>
    tpu.vector_store %arg2[%c0_8, %c0_9], %10 {strides = array<i32>} : memref<4x128xf32, #tpu.memory_space<vmem>>, vector<4x128xf32>,
    return
  }
  func.func @transform_0(%arg0: i32) -> (i32, i32, i32) {
    %c0_i32 = arith.constant 0 : i32
    %c0_i32_0 = arith.constant 0 : i32
    %c0_i32_1 = arith.constant 0 : i32
    return %c0_i32, %arg0, %c0_i32_0 : i32, i32, i32
  }
  func.func @transform_1(%arg0: i32) -> (i32, i32) {
    %c0_i32 = arith.constant 0 : i32
    %c0_i32_0 = arith.constant 0 : i32
    return %arg0, %c0_i32 : i32, i32
  }
}

</mosaic_0001>

<llo_original>
// kernel: maxpool2d_pallas.1
$region0: #{maxpool2d_pallas.1}
  #allocation0 [shape = 'u32[]', space=smem, size = 0x4, offset = 0x4, fixed_abs, tag = 'smem constant byte address 0x4 - core index']
  #allocation1 [shape = 'u32[144,128]{1,0:T(1,128)}', space=vmem, size = 0x12000, scoped, tag = 'internal scratch']
  %s0 = inlined_call_operand.vmem [shape: f32[4,4,128], index: 0, kind: input, shape index: {}]
  %s1 = inlined_call_operand.vmem [shape: f32[4,128], index: 1, kind: output, shape index: {}]
  %s2 = sld [smem:[#allocation0]]
  $region14: #{maxpool2d_pallas.1} parent=0
    _
  %s4 = ssub.s32 1, %s2
  %s5 = scalar_select 0, %s4, %s2
  // Predicated region
  $region2: #{maxpool2d_pallas.1} parent=0 // pred_check
    _
  $region3: #{maxpool2d_pallas.1} parent=0 // pred_check_branch
    %7 = sbr.rel (0) target = $region5
  $region4: #{maxpool2d_pallas.1} parent=0 // pred_region
    _
  $region5: #{maxpool2d_pallas.1} parent=0 // pred_fallthru
    _
  %v8 = vld [vmem:[%s0] sm:$0xf]
  %s9 = scalar_lea.vmem %s0, 4
  %v10 = vld [vmem:[%s9] sm:$0xf]
  %v11 = vmax.f32 %v8, %v10
  %s12 = scalar_lea.vmem %s0, 8
  %v13 = vld [vmem:[%s12] sm:$0xf]
  %v14 = vmax.f32 %v11, %v13
  %s15 = scalar_lea.vmem %s0, 12
  %v16 = vld [vmem:[%s15] sm:$0xf]
  %v17 = vmax.f32 %v14, %v16
  %18 = vst [vmem:[%s1] sm:$0xf] %v17
  // Predicated region
  $region6: #{maxpool2d_pallas.1} parent=0 // pred_check
    _
  $region7: #{maxpool2d_pallas.1} parent=0 // pred_check_branch
    %20 = sbr.rel (0) target = $region9
  $region8: #{maxpool2d_pallas.1} parent=0 // pred_region
    _
  $region9: #{maxpool2d_pallas.1} parent=0 // pred_fallthru
    _
  // Predicated region
  $region10: #{maxpool2d_pallas.1} parent=0 // pred_check
    _
  $region11: #{maxpool2d_pallas.1} parent=0 // pred_check_branch
    %22 = sbr.rel (0) target = $region13
  $region12: #{maxpool2d_pallas.1} parent=0 // pred_region
    _
  $region13: #{maxpool2d_pallas.1} parent=0 // pred_fallthru
    _

</llo_original>
